<compile_context>
chip_gen: v6e
topology: v6e:2x2x1
jax: 0.10.0
libtpu: 0.0.40
codegen_flags: <defaults>
</compile_context>

<pallas_src>
import functools

import jax
import jax.numpy as jnp
from jax.experimental import pallas as pl
from jax.experimental.pallas import tpu as pltpu


def _ls_ce_kernel(x_ref, t_ref, nll_ref, sm_ref, *, num_classes, mask_value):
    """One (C, TR, 128) logits tile + (TR, 128) targets tile -> 2 scalar partial sums."""
    x = x_ref[...].astype(jnp.float32)          # (C, TR, 128); widen in-register only
    t = t_ref[...]                              # (TR, 128) int32 class indices

    # log-sum-exp and plain sum over the class axis (leading dim => C-1 vreg ops).
    m = jnp.max(x, axis=0)                                      # (TR, 128)
    lse = jnp.log(jnp.sum(jnp.exp(x - m[None]), axis=0)) + m    # (TR, 128)
    sum_x = jnp.sum(x, axis=0)                                  # (TR, 128)

    # gather(dim=class) via one-hot compare along the leading class axis.
    cls = jax.lax.broadcasted_iota(jnp.int32, x.shape, 0)       # (C, TR, 128)
    x_t = jnp.sum(jnp.where(cls == t[None], x, 0.0), axis=0)    # (TR, 128)

    nll = lse - x_t                       # = -log_softmax(x)[target]
    smooth = num_classes * lse - sum_x    # = -sum_c log_softmax(x)[c]

    if mask_value is not None:            # ignore_index and/or padded columns
        keep = t != mask_value
        nll = jnp.where(keep, nll, 0.0)
        smooth = jnp.where(keep, smooth, 0.0)

    nll_ref[...] = jnp.sum(nll).reshape(1, 1)
    sm_ref[...] = jnp.sum(smooth).reshape(1, 1)


def _choose_row_tile(num_col_groups, num_classes, itemsize, target_tile_bytes):
    """Pick how many 128-lane column groups each tile covers (sublane dim)."""
    budget = max(1, target_tile_bytes // (num_classes * 128 * itemsize))
    if budget >= num_col_groups:
        return num_col_groups             # one tile spans the whole spatial axis
    return max(8, (budget // 8) * 8)      # partial tiles must be sublane-aligned


def cross_entropy_with_label_smoothing(
    y_pred, y_true, *, smooth_factor=0.1, ignore_index=None,
    target_tile_bytes=2 * 1024 * 1024,
):
    """y_pred: (N, C, H, W) logits (NCHW like PyTorch); y_true: (N, H, W) int."""
    N, C, H, W = y_pred.shape
    S = H * W
    M = N * S                             # .mean() denominator (see header note)
    itemsize = jnp.dtype(y_pred.dtype).itemsize

    cols = (S + 127) // 128               # number of 128-lane column groups
    tile_rows = _choose_row_tile(cols, C, itemsize, target_tile_bytes)
    cols_pad = ((cols + tile_rows - 1) // tile_rows) * tile_rows
    s_pad = cols_pad * 128
    grid = (N, cols_pad // tile_rows)

    # Sentinel used to zero out ignored pixels and/or padded columns.
    if ignore_index is not None:
        mask_value = ignore_index
    elif s_pad != S:
        mask_value = -1                   # valid class indices are always >= 0
    else:
        mask_value = None

    # Free, contiguous reshapes only (no NCHW->NHWC transpose through HBM).
    x = y_pred.reshape(N, C, S)
    t = y_true.astype(jnp.int32).reshape(N, S)
    if s_pad != S:
        x = jnp.pad(x, ((0, 0), (0, 0), (0, s_pad - S)))
        t = jnp.pad(t, ((0, 0), (0, s_pad - S)), constant_values=mask_value)
    x = x.reshape(N, C, cols_pad, 128)
    t = t.reshape(N, cols_pad, 128)

    kernel = functools.partial(_ls_ce_kernel, num_classes=C, mask_value=mask_value)

    # TODO(synk): for vocab-scale C, add a class-tile grid axis with an online
    # (running max / logsumexp) reduction so the block stays VMEM-bounded.
    nll_parts, smooth_parts = pl.pallas_call(
        kernel,
        out_shape=(
            jax.ShapeDtypeStruct((N, grid[1], 1, 1), jnp.float32),
            jax.ShapeDtypeStruct((N, grid[1], 1, 1), jnp.float32),
        ),
        grid_spec=pltpu.PrefetchScalarGridSpec(
            num_scalar_prefetch=0,
            grid=grid,
            in_specs=[
                pl.BlockSpec((None, C, tile_rows, 128), lambda n, s: (n, 0, s, 0)),
                pl.BlockSpec((None, tile_rows, 128), lambda n, s: (n, s, 0)),
            ],
            out_specs=[
                pl.BlockSpec((None, None, 1, 1), lambda n, s: (n, s, 0, 0)),
                pl.BlockSpec((None, None, 1, 1), lambda n, s: (n, s, 0, 0)),
            ],
        ),
        compiler_params=pltpu.CompilerParams(
            dimension_semantics=("parallel", "parallel"),
            vmem_limit_bytes=32 * 1024 * 1024,
        ),
    )(x, t)

    nll_mean = jnp.sum(nll_parts) / M
    smooth_mean = jnp.sum(smooth_parts) / M
    eps_i = smooth_factor / C
    return (1.0 - smooth_factor) * nll_mean + eps_i * smooth_mean


def _reference(y_pred, y_true, *, smooth_factor=0.1):
    # pure-JAX reference of the PyTorch forward (dim=1, no ignore_index, mean)
    logp = jax.nn.log_softmax(y_pred, axis=1)                    # (N,C,H,W)
    tt = y_true.astype(jnp.int32)
    nll = -jnp.take_along_axis(logp, tt[:, None], axis=1)[:, 0]  # (N,H,W)
    smooth = -jnp.sum(logp, axis=1)                              # (N,H,W)
    C = y_pred.shape[1]
    return (1.0 - smooth_factor) * nll.mean() + (smooth_factor / C) * smooth.mean()


if __name__ == "__main__":
    key = jax.random.PRNGKey(0)
    k1, k2 = jax.random.split(key)
    N, C, H, W = 2, 4, 16, 16
    y_pred = jax.random.normal(k1, (N, C, H, W), dtype=jnp.float32)
    y_true = jax.random.randint(k2, (N, H, W), 0, C, dtype=jnp.int32)

    loss = cross_entropy_with_label_smoothing(
        y_pred, y_true, smooth_factor=0.1, ignore_index=None
    )
    loss = jax.block_until_ready(loss)

    ref = _reference(y_pred, y_true, smooth_factor=0.1)
    assert jnp.allclose(loss, ref, atol=1e-5, rtol=1e-5), (loss, ref)
    print("KERNEL_OK")
</pallas_src>

<mosaic_0001>
module attributes {stable_mosaic.version = 11 : i64} {
  func.func @_ls_ce_kernel(%arg0: i32, %arg1: i32, %arg2: memref<1x4x2x128xf32, #tpu.memory_space<vmem>>, %arg3: memref<1x2x128xi32, #tpu.memory_space<vmem>>, %arg4: memref<1x1x1x1xf32, #tpu.memory_space<vmem>>, %arg5: memref<1x1x1x1xf32, #tpu.memory_space<vmem>>) attributes {dimension_semantics = [#tpu.dimension_semantics<parallel>, #tpu.dimension_semantics<parallel>], iteration_bounds = array<i64: 2, 1>, scalar_prefetch = 0 : i64, scratch_operands = 0 : i64, tpu.core_type = #tpu.core_type<tc>, window_params = [{transform_indices = @transform_0, window_bounds = array<i64: 1, 4, 2, 128>}, {transform_indices = @transform_1, window_bounds = array<i64: 1, 2, 128>}, {transform_indices = @transform_2, window_bounds = array<i64: 1, 1, 1, 1>}, {transform_indices = @transform_3, window_bounds = array<i64: 1, 1, 1, 1>}]} {
    %c0 = arith.constant 0 : index
    %c0_0 = arith.constant 0 : index
    %c0_1 = arith.constant 0 : index
    %c0_2 = arith.constant 0 : index
    %0 = vector.load %arg2[%c0, %c0_0, %c0_1, %c0_2] : memref<1x4x2x128xf32, #tpu.memory_space<vmem>>, vector<1x4x2x128xf32>
    %1 = vector.shape_cast %0 : vector<1x4x2x128xf32> to vector<4x2x128xf32>
    %c0_3 = arith.constant 0 : index
    %c0_4 = arith.constant 0 : index
    %c0_5 = arith.constant 0 : index
    %2 = vector.load %arg3[%c0_3, %c0_4, %c0_5] : memref<1x2x128xi32, #tpu.memory_space<vmem>>, vector<1x2x128xi32>
    %3 = vector.shape_cast %2 : vector<1x2x128xi32> to vector<2x128xi32>
    %cst = arith.constant dense<0xFF800000> : vector<2x128xf32>
    %4 = vector.multi_reduction <maximumf>, %1, %cst [0] : vector<4x2x128xf32> to vector<2x128xf32>
    %5 = vector.shape_cast %4 : vector<2x128xf32> to vector<1x2x128xf32>
    %6 = vector.broadcast %5 : vector<1x2x128xf32> to vector<4x2x128xf32>
    %7 = arith.subf %1, %6 : vector<4x2x128xf32>
    %8 = math.exp %7 : vector<4x2x128xf32>
    %cst_6 = arith.constant dense<0.000000e+00> : vector<2x128xf32>
    %9 = vector.multi_reduction <add>, %8, %cst_6 [0] : vector<4x2x128xf32> to vector<2x128xf32>
    %10 = math.log %9 : vector<2x128xf32>
    %11 = arith.addf %10, %4 : vector<2x128xf32>
    %cst_7 = arith.constant dense<0.000000e+00> : vector<2x128xf32>
    %12 = vector.multi_reduction <add>, %1, %cst_7 [0] : vector<4x2x128xf32> to vector<2x128xf32>
    %13 = tpu.iota {dimensions = array<i32: 0>} : vector<4x2x128xi32>
    %14 = vector.shape_cast %3 : vector<2x128xi32> to vector<1x2x128xi32>
    %15 = vector.broadcast %14 : vector<1x2x128xi32> to vector<4x2x128xi32>
    %16 = arith.cmpi eq, %13, %15 : vector<4x2x128xi32>
    %cst_8 = arith.constant 0.000000e+00 : f32
    %17 = vector.broadcast %cst_8 : f32 to vector<4x2x128xf32>
    %18 = arith.select %16, %1, %17 : vector<4x2x128xi1>, vector<4x2x128xf32>
    %cst_9 = arith.constant dense<0.000000e+00> : vector<2x128xf32>
    %19 = vector.multi_reduction <add>, %18, %cst_9 [0] : vector<4x2x128xf32> to vector<2x128xf32>
    %20 = arith.subf %11, %19 : vector<2x128xf32>
    %cst_10 = arith.constant 4.000000e+00 : f32
    %21 = vector.broadcast %cst_10 : f32 to vector<2x128xf32>
    %22 = arith.mulf %21, %11 : vector<2x128xf32>
    %23 = arith.subf %22, %12 : vector<2x128xf32>
    %24 = vector.shape_cast %20 : vector<2x128xf32> to vector<1x2x128xf32>
    %cst_11 = arith.constant dense<0.000000e+00> : vector<1xf32>
    %25 = vector.multi_reduction <add>, %24, %cst_11 [1, 2] : vector<1x2x128xf32> to vector<1xf32>
    %26 = vector.shape_cast %25 : vector<1xf32> to vector<1x1x1xf32>
    %27 = vector.extract %26[0, 0, 0] : f32 from vector<1x1x1xf32>
    %28 = vector.broadcast %27 : f32 to vector<1x1xf32>
    %c0_12 = arith.constant 0 : index
    %c0_13 = arith.constant 0 : index
    %c0_14 = arith.constant 0 : index
    %c0_15 = arith.constant 0 : index
    %29 = vector.load %arg4[%c0_12, %c0_13, %c0_14, %c0_15] : memref<1x1x1x1xf32, #tpu.memory_space<vmem>>, vector<1x1x1x1xf32>
    %30 = vector.shape_cast %29 : vector<1x1x1x1xf32> to vector<1x1xf32>
    %31 = vector.shape_cast %28 : vector<1x1xf32> to vector<1x1x1x1xf32>
    tpu.vector_store %arg4[%c0_12, %c0_13, %c0_14, %c0_15], %31 {strides = array<i32>} : memref<1x1x1x1xf32, #tpu.memory_space<vmem>>, vector<1x1x1x1xf32>,
    %32 = vector.shape_cast %23 : vector<2x128xf32> to vector<1x2x128xf32>
    %cst_16 = arith.constant dense<0.000000e+00> : vector<1xf32>
    %33 = vector.multi_reduction <add>, %32, %cst_16 [1, 2] : vector<1x2x128xf32> to vector<1xf32>
    %34 = vector.shape_cast %33 : vector<1xf32> to vector<1x1x1xf32>
    %35 = vector.extract %34[0, 0, 0] : f32 from vector<1x1x1xf32>
    %36 = vector.broadcast %35 : f32 to vector<1x1xf32>
    %c0_17 = arith.constant 0 : index
    %c0_18 = arith.constant 0 : index
    %c0_19 = arith.constant 0 : index
    %c0_20 = arith.constant 0 : index
    %37 = vector.load %arg5[%c0_17, %c0_18, %c0_19, %c0_20] : memref<1x1x1x1xf32, #tpu.memory_space<vmem>>, vector<1x1x1x1xf32>
    %38 = vector.shape_cast %37 : vector<1x1x1x1xf32> to vector<1x1xf32>
    %39 = vector.shape_cast %36 : vector<1x1xf32> to vector<1x1x1x1xf32>
    tpu.vector_store %arg5[%c0_17, %c0_18, %c0_19, %c0_20], %39 {strides = array<i32>} : memref<1x1x1x1xf32, #tpu.memory_space<vmem>>, vector<1x1x1x1xf32>,
    return
  }
  func.func @transform_0(%arg0: i32, %arg1: i32) -> (i32, i32, i32, i32) {
    %c0_i32 = arith.constant 0 : i32
    %c0_i32_0 = arith.constant 0 : i32
    %c0_i32_1 = arith.constant 0 : i32
    return %arg0, %c0_i32, %arg1, %c0_i32_0 : i32, i32, i32, i32
  }
  func.func @transform_1(%arg0: i32, %arg1: i32) -> (i32, i32, i32) {
    %c0_i32 = arith.constant 0 : i32
    %c0_i32_0 = arith.constant 0 : i32
    return %arg0, %arg1, %c0_i32 : i32, i32, i32
  }
  func.func @transform_2(%arg0: i32, %arg1: i32) -> (i32, i32, i32, i32) {
    %c0_i32 = arith.constant 0 : i32
    %c0_i32_0 = arith.constant 0 : i32
    %c0_i32_1 = arith.constant 0 : i32
    return %arg0, %arg1, %c0_i32, %c0_i32_0 : i32, i32, i32, i32
  }
  func.func @transform_3(%arg0: i32, %arg1: i32) -> (i32, i32, i32, i32) {
    %c0_i32 = arith.constant 0 : i32
    %c0_i32_0 = arith.constant 0 : i32
    %c0_i32_1 = arith.constant 0 : i32
    return %arg0, %arg1, %c0_i32, %c0_i32_0 : i32, i32, i32, i32
  }
}

</mosaic_0001>

<llo_original>
// kernel: tpu_custom_call.1
$region0: #{tpu_custom_call.1}
  #allocation0 [shape = 'u32[]', space=smem, size = 0x4, offset = 0x4, fixed_abs, tag = 'smem constant byte address 0x4 - core index']
  #allocation1 [shape = 'u32[144,128]{1,0:T(1,128)}', space=vmem, size = 0x12000, scoped, tag = 'internal scratch']
  %s0 = inlined_call_operand.hbm [shape: f32[2,4,2,128], index: 0, kind: input, shape index: {}]
  %s1 = inlined_call_operand.hbm [shape: s32[2,2,128], index: 1, kind: input, shape index: {}]
  %s2 = inlined_call_operand.vmem [shape: f32[2,1,1,1], index: 2, kind: output, shape index: {0}]
  %s3 = inlined_call_operand.vmem [shape: f32[2,1,1,1], index: 3, kind: output, shape index: {1}]
  %4 = xla_tuple %s2, %s3
  %s5 = sld [smem:[#allocation0]]
  $region57: #{tpu_custom_call.1} parent=0
    _
  %s7 = ssub.s32 1, %s5
  %s8 = scalar_select 0, %s7, %s5
  $region1: #{tpu_custom_call.1} parent=0
    #allocation2 [shape = 'u8[8192]{0}', space=vmem, size = 0x2000, scoped, tag = 'input window, operand 0']
    #allocation3 [shape = 's32[2]{0}', space=sflag, size = 0x8, scoped, tag = 'scoped memory for tpu_custom_call.1']
    #allocation4 [shape = 'u8[2048]{0}', space=vmem, size = 0x800, scoped, tag = 'input window, operand 1']
    #allocation5 [shape = 's32[2]{0}', space=sflag, size = 0x8, scoped, tag = 'scoped memory for tpu_custom_call.1']
    %9 = vsyncpa [#allocation3], 0
    %s10 = scalar_lea.sflag [#allocation3], 1
    %11 = vsyncpa %s10, 0
    %12 = vsyncpa [#allocation5], 0
    %s13 = scalar_lea.sflag [#allocation5], 1
    %14 = vsyncpa %s13, 0
    loop: start=0, step=1, limit=4
    $region2: #{tpu_custom_call.1} parent=1 // loop_pre_header
      _
    $region3: #{tpu_custom_call.1} parent=1 // loop_header
      %s16 = sphi 0, %s20
      %p17 = scmp.ge.s32.totalorder %s16, 4
      %s23 = sphi 0, %s35
      %s24 = sphi 0, %s31
      %s25 = sphi 0, %s23
      %s26 = sphi 0, %s24
      %s27 = sphi 0, %s25
      %s28 = sphi 0, %s26
      %s40 = sphi 0, %s42
      %s43 = sphi 0, %s40
      %s44 = sphi 0, %s43
      %s60 = sphi 0, %s44
      %s68 = sphi 0, %s70
      %s71 = sphi 0, %s68
      %s72 = sphi 0, %s71
      %s88 = sphi 0, %s72
      %s96 = sphi 0, %s98
      %s99 = sphi 0, %s96
      %s100 = sphi 0, %s99
      %s116 = sphi 0, %s100
      %s124 = sphi 0, %s126
      %s127 = sphi 0, %s124
      %s128 = sphi 0, %s127
      %s144 = sphi 0, %s128
    $region4: #{tpu_custom_call.1} parent=1 // loop_header_branch
      %19 = sbr.rel (%p17) target = $region8
    $region5: #{tpu_custom_call.1} parent=1 // loop_body
      %s21 = ssub.s32 %s16, 1
      %s22 = ssub.s32 %s16, 2
      %s29 = sadd.s32 1, %s24
      %p30 = scmp.ge.s32.totalorder %s29, 1
      %s31 = scalar_select %p30, 0, %s29
      %s32 = sadd.s32 1, %s23
      %s33 = scalar_select %p30, %s32, %s23
      %p34 = scmp.ge.s32.totalorder %s33, 2
      %s35 = scalar_select %p34, 0, %s33
      %s36 = ssub.s32 %s23, %s35
      %s37 = ssub.s32 %s24, %s31
      %s38 = sor.u32 %s36, %s37
      %p39 = scmp.eq.s32.totalorder %s38, 0
      %s41 = sadd.s32 %s40, 1
      %s42 = scalar_select %p39, %s40, %s41
      %p45 = pneg %p39
      %p46 = scmp.eq.s32.totalorder %s16, 1
      %p47 = por %p45, %p46
      %p48 = scmp.ne.s32.totalorder %s40, %s43
      %p49 = scmp.eq.s32.totalorder %s16, 0
      %p50 = por %p48, %p49
      %p51 = scmp.ne.s32.totalorder %s40, %s43
      %p52 = scmp.eq.s32.totalorder %s21, 1
      %p53 = por %p51, %p52
      %p54 = scmp.ne.s32.totalorder %s43, %s44
      %p55 = scmp.eq.s32.totalorder %s21, 0
      %p56 = por %p54, %p55
      %p57 = scmp.ne.s32.totalorder %s43, %s44
      %p58 = scmp.eq.s32.totalorder %s22, 1
      %p59 = por %p57, %p58
      %p61 = scmp.ne.s32.totalorder %s44, %s60
      %p62 = scmp.eq.s32.totalorder %s22, 0
      %p63 = por %p61, %p62
      %s64 = ssub.s32 %s23, %s35
      %s65 = ssub.s32 %s24, %s31
      %s66 = sor.u32 %s64, %s65
      %p67 = scmp.eq.s32.totalorder %s66, 0
      %s69 = sadd.s32 %s68, 1
      %s70 = scalar_select %p67, %s68, %s69
      %p73 = pneg %p67
      %p74 = scmp.eq.s32.totalorder %s16, 1
      %p75 = por %p73, %p74
      %p76 = scmp.ne.s32.totalorder %s68, %s71
      %p77 = scmp.eq.s32.totalorder %s16, 0
      %p78 = por %p76, %p77
      %p79 = scmp.ne.s32.totalorder %s68, %s71
      %p80 = scmp.eq.s32.totalorder %s21, 1
      %p81 = por %p79, %p80
      %p82 = scmp.ne.s32.totalorder %s71, %s72
      %p83 = scmp.eq.s32.totalorder %s21, 0
      %p84 = por %p82, %p83
      %p85 = scmp.ne.s32.totalorder %s71, %s72
      %p86 = scmp.eq.s32.totalorder %s22, 1
      %p87 = por %p85, %p86
      %p89 = scmp.ne.s32.totalorder %s72, %s88
      %p90 = scmp.eq.s32.totalorder %s22, 0
      %p91 = por %p89, %p90
      %s92 = ssub.s32 %s23, %s35
      %s93 = ssub.s32 %s24, %s31
      %s94 = sor.u32 %s92, %s93
      %p95 = scmp.eq.s32.totalorder %s94, 0
      %s97 = sadd.s32 %s96, 1
      %s98 = scalar_select %p95, %s96, %s97
      %p101 = pneg %p95
      %p102 = scmp.eq.s32.totalorder %s16, 1
      %p103 = por %p101, %p102
      %p104 = scmp.ne.s32.totalorder %s96, %s99
      %p105 = scmp.eq.s32.totalorder %s16, 0
      %p106 = por %p104, %p105
      %p107 = scmp.ne.s32.totalorder %s96, %s99
      %p108 = scmp.eq.s32.totalorder %s21, 1
      %p109 = por %p107, %p108
      %p110 = scmp.ne.s32.totalorder %s99, %s100
      %p111 = scmp.eq.s32.totalorder %s21, 0
      %p112 = por %p110, %p111
      %p113 = scmp.ne.s32.totalorder %s99, %s100
      %p114 = scmp.eq.s32.totalorder %s22, 1
      %p115 = por %p113, %p114
      %p117 = scmp.ne.s32.totalorder %s100, %s116
      %p118 = scmp.eq.s32.totalorder %s22, 0
      %p119 = por %p117, %p118
      %s120 = ssub.s32 %s23, %s35
      %s121 = ssub.s32 %s24, %s31
      %s122 = sor.u32 %s120, %s121
      %p123 = scmp.eq.s32.totalorder %s122, 0
      %s125 = sadd.s32 %s124, 1
      %s126 = scalar_select %p123, %s124, %s125
      %p129 = pneg %p123
      %p130 = scmp.eq.s32.totalorder %s16, 1
      %p131 = por %p129, %p130
      %p132 = scmp.ne.s32.totalorder %s124, %s127
      %p133 = scmp.eq.s32.totalorder %s16, 0
      %p134 = por %p132, %p133
      %p135 = scmp.ne.s32.totalorder %s124, %s127
      %p136 = scmp.eq.s32.totalorder %s21, 1
      %p137 = por %p135, %p136
      %p138 = scmp.ne.s32.totalorder %s127, %s128
      %p139 = scmp.eq.s32.totalorder %s21, 0
      %p140 = por %p138, %p139
      %p141 = scmp.ne.s32.totalorder %s127, %s128
      %p142 = scmp.eq.s32.totalorder %s22, 1
      %p143 = por %p141, %p142
      %p145 = scmp.ne.s32.totalorder %s128, %s144
      %p146 = scmp.eq.s32.totalorder %s22, 0
      %p147 = por %p145, %p146
      %p148 = scmp.le.s32.totalorder 1, %s16
      %p149 = scmp.lt.s32.totalorder %s16, 3
      %p150 = pnand %p148, %p149
      %p151 = pneg %p150
      // Predicated region
      $region9: #{tpu_custom_call.1} parent=5 // pred_check
        _
      $region10: #{tpu_custom_call.1} parent=5 // pred_check_branch
        %153 = sbr.rel (%p150) target = $region12
      $region11: #{tpu_custom_call.1} parent=5 // pred_region
        %s154 = ssub.s32 %s16, 1
      $region12: #{tpu_custom_call.1} parent=5 // pred_fallthru
        _
      %p155 = scmp.lt.s32.totalorder %s16, 2
      // Predicated region
      $region13: #{tpu_custom_call.1} parent=5 // pred_check
        %p156 = pneg %p155
      $region14: #{tpu_custom_call.1} parent=5 // pred_check_branch
        %158 = sbr.rel (%p156) target = $region16
      $region15: #{tpu_custom_call.1} parent=5 // pred_region
        // Predicated region
        $region17: #{tpu_custom_call.1} parent=15 // pred_check
          %p159 = pneg %p50
        $region18: #{tpu_custom_call.1} parent=15 // pred_check_branch
          %161 = sbr.rel (%p159) target = $region20
        $region19: #{tpu_custom_call.1} parent=15 // pred_region
          %s162 = sand.u32 %s40, 1
          %s163 = scalar_lea.sflag [#allocation3], %s162
          %s164 = sand.u32 %s40, 1
          %s165 = smul.addr %s164, 8
          %s166 = scalar_lea.vmem [#allocation2], %s165
          %s168 = ssub.s32 128, 128
          %169 = vsyncadd %s163, %s168
          %s170 = smul.addr %s23, 4
          %s171 = sadd.s32 %s24, %s170
          %s172 = smul.addr %s171, 32
          %s173 = scalar_lea.hbm %s0, %s172
          %s174 = sshll.u32 %s166, 4
          %s175 = int_to_ptr.vmem [resolvable:$true] %s174
          %180 = dma.hbm_to_vmem [thread:$0]  %s173, 128, %s175, %s163, 32, 32, 2
        $region20: #{tpu_custom_call.1} parent=15 // pred_fallthru
          _
        // Predicated region
        $region21: #{tpu_custom_call.1} parent=15 // pred_check
          %p181 = pneg %p78
        $region22: #{tpu_custom_call.1} parent=15 // pred_check_branch
          %183 = sbr.rel (%p181) target = $region24
        $region23: #{tpu_custom_call.1} parent=15 // pred_region
          %s184 = sand.u32 %s68, 1
          %s185 = scalar_lea.sflag [#allocation5], %s184
          %s186 = sand.u32 %s68, 1
          %s187 = smul.addr %s186, 2
          %s188 = scalar_lea.vmem [#allocation4], %s187
          %s190 = ssub.s32 32, 32
          %191 = vsyncadd %s185, %s190
          %s192 = sadd.s32 %s24, %s23
          %s193 = smul.addr %s192, 32
          %s194 = scalar_lea.hbm %s1, %s193
          %s196 = sshll.u32 %s188, 4
          %s197 = int_to_ptr.vmem [resolvable:$true] %s196
          %199 = dma.hbm_to_vmem [thread:$0]  %s194, 32, %s197, %s185
        $region24: #{tpu_custom_call.1} parent=15 // pred_fallthru
          _
      $region16: #{tpu_custom_call.1} parent=5 // pred_fallthru
        _
      %p200 = scmp.le.s32.totalorder 1, %s16
      %p201 = scmp.lt.s32.totalorder %s16, 3
      %p202 = pnand %p200, %p201
      %p203 = pneg %p202
      // Predicated region
      $region25: #{tpu_custom_call.1} parent=5 // pred_check
        _
      $region26: #{tpu_custom_call.1} parent=5 // pred_check_branch
        %205 = sbr.rel (%p202) target = $region28
      $region27: #{tpu_custom_call.1} parent=5 // pred_region
        %s206 = ssub.s32 %s16, 1
        %s207 = sand.u32 %s43, 1
        %s208 = scalar_lea.sflag [#allocation3], %s207
        %s209 = sand.u32 %s43, 1
        %s210 = smul.addr %s209, 8
        %s211 = scalar_lea.vmem [#allocation2], %s210
        // Predicated region
        $region29: #{tpu_custom_call.1} parent=27 // pred_check
          %p212 = pneg %p56
        $region30: #{tpu_custom_call.1} parent=27 // pred_check_branch
          %214 = sbr.rel (%p212) target = $region32
        $region31: #{tpu_custom_call.1} parent=27 // pred_region
          %215 = dma.done %s208, 128
        $region32: #{tpu_custom_call.1} parent=27 // pred_fallthru
          _
        %s216 = sand.u32 %s71, 1
        %s217 = scalar_lea.sflag [#allocation5], %s216
        %s218 = sand.u32 %s71, 1
        %s219 = smul.addr %s218, 2
        %s220 = scalar_lea.vmem [#allocation4], %s219
        // Predicated region
        $region33: #{tpu_custom_call.1} parent=27 // pred_check
          %p221 = pneg %p84
        $region34: #{tpu_custom_call.1} parent=27 // pred_check_branch
          %223 = sbr.rel (%p221) target = $region36
        $region35: #{tpu_custom_call.1} parent=27 // pred_region
          %224 = dma.done %s217, 32
        $region36: #{tpu_custom_call.1} parent=27 // pred_fallthru
          _
        %s225 = sand.u32 %s43, 1
        %s226 = scalar_lea.sflag [#allocation3], %s225
        %s227 = sand.u32 %s43, 1
        %s228 = smul.addr %s227, 8
        %s229 = scalar_lea.vmem [#allocation2], %s228
        %p230 = pneg %p56
        %p231 = pneg %p53
        %s232 = sand.u32 %s71, 1
        %s233 = scalar_lea.sflag [#allocation5], %s232
        %s234 = sand.u32 %s71, 1
        %s235 = smul.addr %s234, 2
        %s236 = scalar_lea.vmem [#allocation4], %s235
        %p237 = pneg %p84
        %p238 = pneg %p81
        %p239 = pneg %p112
        %p240 = pneg %p109
        %p241 = scmp.lt.s32.totalorder %s25, 1
        %s242 = scalar_select %p241, %s25, 1
        %p243 = scmp.lt.s32.totalorder %s26, 0
        %s244 = scalar_select %p243, %s26, 0
        %s245 = sadd.s32 %s244, %s242
        %s246 = scalar_lea.vmem %s2, %s245
        %p247 = pneg %p140
        %p248 = pneg %p137
        %p249 = scmp.lt.s32.totalorder %s25, 1
        %s250 = scalar_select %p249, %s25, 1
        %p251 = scmp.lt.s32.totalorder %s26, 0
        %s252 = scalar_select %p251, %s26, 0
        %s253 = sadd.s32 %s252, %s250
        %s254 = scalar_lea.vmem %s3, %s253
        %p255 = scmp.lt.s32.totalorder %s25, 1
        %s256 = scalar_select %p255, %s25, 1
        %p257 = scmp.lt.s32.totalorder %s26, 0
        %s258 = scalar_select %p257, %s26, 0
        %s259 = sadd.s32 %s258, %s256
        %s260 = scalar_lea.vmem %s2, %s259
        %p261 = scmp.lt.s32.totalorder %s25, 1
        %s262 = scalar_select %p261, %s25, 1
        %p263 = scmp.lt.s32.totalorder %s26, 0
        %s264 = scalar_select %p263, %s26, 0
        %s265 = sadd.s32 %s264, %s262
        %s266 = scalar_lea.vmem %s3, %s265
        %v267 = vld [vmem:[%s211] sm:$0x3]
        %v268 = vld [vmem:[%s211 + $0x2] sm:$0x3]
        %v269 = vld [vmem:[%s211 + $0x4] sm:$0x3]
        %v270 = vld [vmem:[%s211 + $0x6] sm:$0x3]
        %v271 = vld [vmem:[%s220] sm:$0x3]
        %vm272 = vcmask 1041408
        %v273 = vsel %vm272, %v267, -inf
        %v274 = vsel %vm272, %v268, -inf
        %v275 = vsel %vm272, %v269, -inf
        %v276 = vsel %vm272, %v270, -inf
        %v277 = vmax.f32 %v273, %v274
        %v278 = vmax.f32 %v275, %v276
        %v279 = vmax.f32 %v277, %v278
        %v280 = vsub.f32 %v267, %v279
        %v281 = vsub.f32 %v268, %v279
        %v282 = vsub.f32 %v269, %v279
        %v283 = vsub.f32 %v270, %v279
        %v284 = vmul.f32 %v280, 1.442695
        %v285 = vpow.pop %v284
        %v286 = vmul.f32 %v281, 1.442695
        %v287 = vpow.pop %v286
        %v288 = vmul.f32 %v282, 1.442695
        %v289 = vpow.pop %v288
        %v290 = vmul.f32 %v283, 1.442695
        %v291 = vpow.pop %v290
        %v292 = vsel %vm272, %v285, 0.0
        %v293 = vsel %vm272, %v287, 0.0
        %v294 = vadd.f32 %v292, %v293
        %v295 = vsel %vm272, %v289, 0.0
        %v296 = vadd.f32 %v294, %v295
        %v297 = vsel %vm272, %v291, 0.0
        %v298 = vadd.f32 %v296, %v297
        %v299 = vlog2.pop %v298
        %v300 = vmul.f32 %v299, 0.6931472
        %v301 = vadd.f32 %v300, %v279
        %v302 = vsel %vm272, %v267, 0.0
        %v303 = vsel %vm272, %v268, 0.0
        %v304 = vadd.f32 %v302, %v303
        %v305 = vsel %vm272, %v269, 0.0
        %v306 = vadd.f32 %v304, %v305
        %v307 = vsel %vm272, %v270, 0.0
        %v308 = vadd.f32 %v306, %v307
        %vm309 = vcmp.eq.s32.totalorder %v271, 0
        %vm310 = vcmp.eq.s32.totalorder %v271, 1
        %vm311 = vcmp.eq.s32.totalorder %v271, 2
        %vm312 = vcmp.eq.s32.totalorder %v271, 3
        %v313 = vsel %vm309, %v267, 0.0
        %v314 = vsel %vm310, %v268, 0.0
        %v315 = vsel %vm311, %v269, 0.0
        %v316 = vsel %vm312, %v270, 0.0
        %v317 = vsel %vm272, %v313, 0.0
        %v318 = vsel %vm272, %v314, 0.0
        %v319 = vadd.f32 %v317, %v318
        %v320 = vsel %vm272, %v315, 0.0
        %v321 = vadd.f32 %v319, %v320
        %v322 = vsel %vm272, %v316, 0.0
        %v323 = vadd.f32 %v321, %v322
        %v324 = vsub.f32 %v301, %v323
        %v325 = vmul.f32 %v301, 4.0
        %v326 = vsub.f32 %v325, %v308
        %v327 = vsel %vm272, %v324, 0.0
        %328 = vadd.xlane.f32.xlu0 %v327
        %v329 = vpop.xlane.xlu0 %328
        %v330 = vrot.slane %v329, 4
        %v331 = vadd.f32 %v329, %v330
        %v332 = vrot.slane %v331, 2
        %v333 = vadd.f32 %v331, %v332
        %v334 = vrot.slane %v333, 1
        %v335 = vadd.f32 %v333, %v334
        %s336 = vtos %v335
        %v337 = vstv %s336
        %vm338 = vcmask 0
        %339 = vst.msk [vmem:[%s260] sm:$0x1] %vm338, %v337
        %v340 = vsel %vm272, %v326, 0.0
        %341 = vadd.xlane.f32.xlu0 %v340
        %v342 = vpop.xlane.xlu0 %341
        %v343 = vrot.slane %v342, 4
        %v344 = vadd.f32 %v342, %v343
        %v345 = vrot.slane %v344, 2
        %v346 = vadd.f32 %v344, %v345
        %v347 = vrot.slane %v346, 1
        %v348 = vadd.f32 %v346, %v347
        %s349 = vtos %v348
        %v350 = vstv %s349
        %351 = vst.msk [vmem:[%s266] sm:$0x1] %vm338, %v350
        %p352 = scmp.lt.s32.totalorder %s25, 1
        %s353 = scalar_select %p352, %s25, 1
        %p354 = scmp.lt.s32.totalorder %s26, 0
        %s355 = scalar_select %p354, %s26, 0
        %s356 = sadd.s32 %s355, %s353
        %s357 = scalar_lea.vmem %s2, %s356
        %p358 = scmp.lt.s32.totalorder %s25, 1
        %s359 = scalar_select %p358, %s25, 1
        %p360 = scmp.lt.s32.totalorder %s26, 0
        %s361 = scalar_select %p360, %s26, 0
        %s362 = sadd.s32 %s361, %s359
        %s363 = scalar_lea.vmem %s3, %s362
        // Predicated region
        $region37: #{tpu_custom_call.1} parent=27 // pred_check
          %p364 = pneg %p109
        $region38: #{tpu_custom_call.1} parent=27 // pred_check_branch
          %366 = sbr.rel (%p364) target = $region40
        $region39: #{tpu_custom_call.1} parent=27 // pred_region
          _
        $region40: #{tpu_custom_call.1} parent=27 // pred_fallthru
          _
        // Predicated region
        $region41: #{tpu_custom_call.1} parent=27 // pred_check
          %p367 = pneg %p137
        $region42: #{tpu_custom_call.1} parent=27 // pred_check_branch
          %369 = sbr.rel (%p367) target = $region44
        $region43: #{tpu_custom_call.1} parent=27 // pred_region
          _
        $region44: #{tpu_custom_call.1} parent=27 // pred_fallthru
          _
      $region28: #{tpu_custom_call.1} parent=5 // pred_fallthru
        _
      %p370 = scmp.le.s32.totalorder 2, %s16
      // Predicated region
      $region45: #{tpu_custom_call.1} parent=5 // pred_check
        %p371 = pneg %p370
      $region46: #{tpu_custom_call.1} parent=5 // pred_check_branch
        %373 = sbr.rel (%p371) target = $region48
      $region47: #{tpu_custom_call.1} parent=5 // pred_region
        %s374 = ssub.s32 %s16, 2
        // Predicated region
        $region49: #{tpu_custom_call.1} parent=47 // pred_check
          %p375 = pneg %p115
        $region50: #{tpu_custom_call.1} parent=47 // pred_check_branch
          %377 = sbr.rel (%p375) target = $region52
        $region51: #{tpu_custom_call.1} parent=47 // pred_region
          %p378 = scmp.lt.s32.totalorder %s27, 1
          %s379 = scalar_select %p378, %s27, 1
          %p380 = scmp.lt.s32.totalorder %s28, 0
          %s381 = scalar_select %p380, %s28, 0
          %s382 = sadd.s32 %s381, %s379
          %s383 = scalar_lea.vmem %s2, %s382
        $region52: #{tpu_custom_call.1} parent=47 // pred_fallthru
          _
        // Predicated region
        $region53: #{tpu_custom_call.1} parent=47 // pred_check
          %p384 = pneg %p143
        $region54: #{tpu_custom_call.1} parent=47 // pred_check_branch
          %386 = sbr.rel (%p384) target = $region56
        $region55: #{tpu_custom_call.1} parent=47 // pred_region
          %p387 = scmp.lt.s32.totalorder %s27, 1
          %s388 = scalar_select %p387, %s27, 1
          %p389 = scmp.lt.s32.totalorder %s28, 0
          %s390 = scalar_select %p389, %s28, 0
          %s391 = sadd.s32 %s390, %s388
          %s392 = scalar_lea.vmem %s3, %s391
        $region56: #{tpu_custom_call.1} parent=47 // pred_fallthru
          _
      $region48: #{tpu_custom_call.1} parent=5 // pred_fallthru
        _
    $region6: #{tpu_custom_call.1} parent=1 // loop_footer
      %s20 = sadd.s32 1, %s16
    $region7: #{tpu_custom_call.1} parent=1 // loop_footer_branch
      %15 = sbr.rel target = $region3
    $region8: #{tpu_custom_call.1} parent=1 // loop_exit
      _
    %393 = vsyncpa [#allocation3], 1
    %s394 = scalar_lea.sflag [#allocation3], 1
    %395 = vsyncpa %s394, 1
    %396 = vsyncpa [#allocation5], 1
    %s397 = scalar_lea.sflag [#allocation5], 1
    %398 = vsyncpa %s397, 1

</llo_original>
